<compile_context>
chip_gen: v6e
topology: v6e:2x2x1
jax: 0.10.0
libtpu: 0.0.40
codegen_flags: <defaults>
</compile_context>

<pallas_src>
import jax
import jax.numpy as jnp
from jax import lax
from jax.experimental import pallas as pl
from jax.experimental.pallas import tpu as pltpu


# ---------------------------------------------------------------------------
# helpers
# ---------------------------------------------------------------------------
def _round_up(x: int, m: int) -> int:
    return ((x + m - 1) // m) * m


def _cdiv(a: int, b: int) -> int:
    return (a + b - 1) // b


def _choose_row_tile(n: int, cap: int = 256) -> int:
    """Rows per grid step: multiple of 8, <= cap; prefer >= 4 grid steps once
    the problem is big enough (v7x megacore + output-writeback pipelining)."""
    n8 = _round_up(max(n, 1), 8)
    if n8 <= cap:
        return n8                    # single step; per-step overhead not worth it
    t = cap
    while t > 8 and _cdiv(n8, t) < 4:
        t //= 2
    return t


def _vmem_limit(need_bytes: int) -> int:
    # Default scoped VMEM is only 16 MiB (v5e) / 32 MiB (v6e, v7x); raise it
    # explicitly but stay under the smallest physical VMEM (64 MiB/TC on v7x).
    return int(min(64 * 1024 * 1024, max(32 * 1024 * 1024, 2 * need_bytes)))


# ---------------------------------------------------------------------------
# kernels
# ---------------------------------------------------------------------------
def _embedding_onehot_kernel(idx_ref, emb_ref, out_ref):
    """Small-vocab path: one-hot MXU gather.

    idx_ref : VMEM (tn, 1) int32   -- this step's indices (streamed block)
    emb_ref : VMEM (Vp, D)         -- full (padded) table, resident every step
    out_ref : VMEM (tn, D)         -- gathered rows
    """
    tn = out_ref.shape[0]
    v = emb_ref.shape[0]
    idx = idx_ref[...]                                        # (tn, 1) int32
    # (tn, 1) broadcast against a lane-iota: native sublane->lane broadcast.
    # Out-of-range indices give an all-zero one-hot row -> zero output row
    # (torch.nn.Embedding would raise; valid inputs are identical).
    onehot = (lax.broadcasted_iota(jnp.int32, (tn, v), 1) == idx)
    onehot = onehot.astype(emb_ref.dtype)                     # (tn, Vp)
    out_ref[...] = jnp.dot(
        onehot, emb_ref[...], preferred_element_type=jnp.float32
    ).astype(out_ref.dtype)


def _embedding_loop_kernel(idx_ref, emb_ref, out_ref):
    """Large-vocab fallback: per-row dynamic-slice gather.

    idx_ref : SMEM (Np,) int32     -- all flattened indices (scalar-prefetched)
    emb_ref : VMEM (V, D)          -- full table, resident every step
    out_ref : VMEM (tn, D)         -- gathered rows
    """
    tn = out_ref.shape[0]
    v = emb_ref.shape[0]
    base = pl.multiple_of(pl.program_id(0) * tn, tn)

    def body(r, carry):
        # torch.nn.Embedding errors on OOB indices; clamp so the dynamic-slice
        # gather can never read outside the table.
        idx = jnp.clip(idx_ref[base + r], 0, v - 1)
        out_ref[pl.ds(r, 1), :] = emb_ref[pl.ds(idx, 1), :]
        return carry

    # unroll=8 keeps LLO scheduling visibility without 256x code bloat.
    lax.fori_loop(0, tn, body, 0, unroll=8)


# ---------------------------------------------------------------------------
# pallas_call wrappers for the two gather implementations
# ---------------------------------------------------------------------------
def _onehot_gather(idx_flat, table, *, np_rows, tn):
    V, D = table.shape
    Vp = _round_up(V, 8)                          # clean MXU K-tile
    table_p = table if Vp == V else jnp.pad(table, ((0, Vp - V), (0, 0)))
    idx_col = idx_flat.reshape(np_rows, 1)

    itemsize = jnp.dtype(table.dtype).itemsize
    vmem_need = (2 * Vp * D * itemsize            # resident table (pipeline bufs)
                 + 2 * tn * D * max(itemsize, 4)  # output double buffer
                 + 2 * tn * 128 * 4               # (tn,1) idx blocks pad to 128 lanes
                 + 2 * tn * Vp * 4                # one-hot spill headroom
                 + (2 << 20))
    cost = pl.CostEstimate(
        flops=2 * np_rows * Vp * D,
        transcendentals=0,
        bytes_accessed=np_rows * 4 + Vp * D * itemsize + np_rows * D * itemsize)

    return pl.pallas_call(
        _embedding_onehot_kernel,
        out_shape=jax.ShapeDtypeStruct((np_rows, D), table.dtype),
        grid=(np_rows // tn,),
        in_specs=[
            pl.BlockSpec((tn, 1), lambda i: (i, 0)),   # streamed index block
            pl.BlockSpec((Vp, D), lambda i: (0, 0)),   # table, resident across steps
        ],
        out_specs=pl.BlockSpec((tn, D), lambda i: (i, 0)),
        compiler_params=pltpu.CompilerParams(
            dimension_semantics=("parallel",),
            vmem_limit_bytes=_vmem_limit(vmem_need)),
        cost_estimate=cost,
    )(idx_col, table_p)


def _loop_gather(idx_flat, table, *, np_rows, tn):
    V, D = table.shape
    itemsize = jnp.dtype(table.dtype).itemsize
    vmem_need = 2 * V * D * itemsize + 2 * tn * D * max(itemsize, 4) + (2 << 20)
    cost = pl.CostEstimate(
        flops=0,
        transcendentals=0,
        bytes_accessed=np_rows * 4 + V * D * itemsize + np_rows * D * itemsize)

    return pl.pallas_call(
        _embedding_loop_kernel,
        out_shape=jax.ShapeDtypeStruct((np_rows, D), table.dtype),
        grid_spec=pltpu.PrefetchScalarGridSpec(
            num_scalar_prefetch=1,                 # idx -> SMEM (capacity ceiling; see TODO)
            grid=(np_rows // tn,),
            in_specs=[pl.BlockSpec((V, D), lambda i, idx: (0, 0))],
            out_specs=pl.BlockSpec((tn, D), lambda i, idx: (i, 0)),
        ),
        compiler_params=pltpu.CompilerParams(
            dimension_semantics=("parallel",),
            vmem_limit_bytes=_vmem_limit(vmem_need)),
        cost_estimate=cost,
    )(idx_flat, table)


# ---------------------------------------------------------------------------
# public forward
# ---------------------------------------------------------------------------
def embedding_table_forward(indices, table, *, onehot_vocab_limit=1024,
                            force_impl=None):
    """indices: (B, S) int32; table: (V, D) float.

    Returns (emb (B,S,D), mask (B,S) bool) matching
    (self.embeddings(indices), torch.ne(indices, 0)) from EmbeddingTable.forward.
    """
    B, S = indices.shape
    V, D = table.shape
    N = B * S

    tn = _choose_row_tile(N)
    np_rows = _round_up(N, tn)

    idx_flat = indices.reshape(N).astype(jnp.int32)
    if np_rows != N:
        # pad with index 0 -> zero (padding) row; padded rows are sliced off below
        idx_flat = jnp.concatenate(
            [idx_flat, jnp.zeros((np_rows - N,), jnp.int32)], axis=0)

    impl = force_impl or ("onehot" if V <= onehot_vocab_limit else "loop")
    if impl == "onehot":
        emb_flat = _onehot_gather(idx_flat, table, np_rows=np_rows, tn=tn)
    else:
        emb_flat = _loop_gather(idx_flat, table, np_rows=np_rows, tn=tn)

    emb = emb_flat[:N].reshape(B, S, D)
    mask = indices != 0          # trivial VPU compare; XLA fuses it for free
    return emb, mask


def make_embedding_table(key, cardinalities, dim):
    """Mimics EmbeddingTable.__init__: offsets start at 1, row 0 = padding."""
    size = 1
    offsets = []
    for c in cardinalities:
        offsets.append(size)
        size += c
    # nn.Embedding default init: N(0,1); padding_idx=0 row zeroed.
    table = jax.random.normal(key, (size, dim), dtype=jnp.float32)
    table = table.at[0].set(0.0)
    return table, offsets, size


if __name__ == "__main__":
    key = jax.random.PRNGKey(0)
    k_tab, k_idx, k_idx2 = jax.random.split(key, 3)

    # synthetic feature registry: 3 feature types with these cardinalities
    cardinalities = [5, 7, 10]              # -> vocab size = 1 + 22 = 23
    dim = 32
    table, offsets, vocab = make_embedding_table(k_tab, cardinalities, dim)

    def check(indices):
        ref_emb = table[indices]
        ref_mask = indices != 0
        for impl in ("onehot", "loop"):
            emb, mask = embedding_table_forward(indices, table, force_impl=impl)
            jax.block_until_ready((emb, mask))
            assert emb.shape == indices.shape + (dim,), (impl, emb.shape)
            assert mask.shape == indices.shape, (impl, mask.shape)
            assert jnp.allclose(emb, ref_emb, atol=1e-5), f"embedding mismatch ({impl})"
            assert jnp.array_equal(mask, ref_mask), f"mask mismatch ({impl})"

    # small shape from the module spec (batch=2, seq=8); value 0 == padding
    batch, seq = 2, 8
    idx_small = jax.random.randint(k_idx, (batch, seq), 0, vocab, dtype=jnp.int32)
    check(idx_small)

    # slightly larger shape: exercises row padding and a multi-step grid
    check(jax.random.randint(k_idx2, (5, 70), 0, vocab, dtype=jnp.int32))

    # default dispatch (vocab=23 <= onehot limit -> one-hot MXU path)
    emb, mask = embedding_table_forward(idx_small, table)
    jax.block_until_ready((emb, mask))

    print("KERNEL_OK")
</pallas_src>

<mosaic_0001>
module attributes {stable_mosaic.version = 11 : i64} {
  func.func @_embedding_onehot_kernel(%arg0: i32, %arg1: memref<16x1xi32, #tpu.memory_space<vmem>>, %arg2: memref<24x32xf32, #tpu.memory_space<vmem>>, %arg3: memref<16x32xf32, #tpu.memory_space<vmem>>) attributes {dimension_semantics = [#tpu.dimension_semantics<parallel>], iteration_bounds = array<i64: 1>, scalar_prefetch = 0 : i64, scratch_operands = 0 : i64, tpu.core_type = #tpu.core_type<tc>, window_params = [{transform_indices = @transform_0, window_bounds = array<i64: 16, 1>}, {pipeline_mode = #tpu.pipeline_mode<synchronous>, transform_indices = @transform_1, window_bounds = array<i64: 24, 32>}, {transform_indices = @transform_2, window_bounds = array<i64: 16, 32>}]} {
    %c0 = arith.constant 0 : index
    %c0_0 = arith.constant 0 : index
    %0 = vector.load %arg1[%c0, %c0_0] : memref<16x1xi32, #tpu.memory_space<vmem>>, vector<16x1xi32>
    %1 = tpu.iota {dimensions = array<i32: 1>} : vector<16x24xi32>
    %2 = vector.broadcast %0 : vector<16x1xi32> to vector<16x24xi32>
    %3 = arith.cmpi eq, %1, %2 : vector<16x24xi32>
    %4 = arith.extui %3 : vector<16x24xi1> to vector<16x24xi32>
    %5 = arith.sitofp %4 : vector<16x24xi32> to vector<16x24xf32>
    %c0_1 = arith.constant 0 : index
    %c0_2 = arith.constant 0 : index
    %6 = vector.load %arg2[%c0_1, %c0_2] : memref<24x32xf32, #tpu.memory_space<vmem>>, vector<24x32xf32>
    %cst = arith.constant dense<0.000000e+00> : vector<16x32xf32>
    %7 = tpu.matmul %5, %6, %cst {dimension_numbers = #tpu.dot_dimension_numbers<[1], [0], [0], [1], [0, 0, 1, 1], [], []>} : vector<16x24xf32>, vector<24x32xf32>, vector<16x32xf32> -> vector<16x32xf32>
    %c0_3 = arith.constant 0 : index
    %c0_4 = arith.constant 0 : index
    %8 = vector.load %arg3[%c0_3, %c0_4] : memref<16x32xf32, #tpu.memory_space<vmem>>, vector<16x32xf32>
    tpu.vector_store %arg3[%c0_3, %c0_4], %7 {strides = array<i32>} : memref<16x32xf32, #tpu.memory_space<vmem>>, vector<16x32xf32>,
    return
  }
  func.func @transform_0(%arg0: i32) -> (i32, i32) {
    %c0_i32 = arith.constant 0 : i32
    %c0_i32_0 = arith.constant 0 : i32
    return %arg0, %c0_i32 : i32, i32
  }
  func.func @transform_1(%arg0: i32) -> (i32, i32) {
    %c0_i32 = arith.constant 0 : i32
    %c0_i32_0 = arith.constant 0 : i32
    %c0_i32_1 = arith.constant 0 : i32
    return %c0_i32, %c0_i32_0 : i32, i32
  }
  func.func @transform_2(%arg0: i32) -> (i32, i32) {
    %c0_i32 = arith.constant 0 : i32
    %c0_i32_0 = arith.constant 0 : i32
    return %arg0, %c0_i32 : i32, i32
  }
}

</mosaic_0001>

<llo_original>
// kernel: tpu_custom_call.1
$region0: #{tpu_custom_call.1}
  #allocation0 [shape = 'u32[]', space=smem, size = 0x4, offset = 0x4, fixed_abs, tag = 'smem constant byte address 0x4 - core index']
  #allocation1 [shape = 'u32[144,128]{1,0:T(1,128)}', space=vmem, size = 0x12000, scoped, tag = 'internal scratch']
  %s0 = inlined_call_operand.vmem [shape: s32[16,1], index: 0, kind: input, shape index: {}]
  %s1 = inlined_call_operand.hbm [shape: f32[24,32], index: 1, kind: input, shape index: {}]
  %s2 = inlined_call_operand.hbm [shape: f32[16,32], index: 2, kind: output, shape index: {}]
  %s3 = sld [smem:[#allocation0]]
  $region22: #{tpu_custom_call.1} parent=0
    _
  %s5 = ssub.s32 1, %s3
  %s6 = scalar_select 0, %s5, %s3
  $region1: #{tpu_custom_call.1} parent=0
    #allocation2 [shape = 'u8[12288]{0}', space=vmem, size = 0x3000, scoped, tag = 'input window, operand 1, single buffered']
    #allocation3 [shape = 's32[1]{0}', space=sflag, size = 0x4, scoped, tag = 'scoped memory for tpu_custom_call.1']
    #allocation4 [shape = 's32[1]{0}', space=sflag, size = 0x4, scoped, tag = 'scoped memory for tpu_custom_call.1']
    #allocation5 [shape = 'u8[8192]{0}', space=vmem, size = 0x2000, scoped, tag = 'output window, operand 0, single buffered']
    %7 = vsyncpa [#allocation3], 0
    %8 = vsyncpa [#allocation4], 0
    // Predicated region
    $region2: #{tpu_custom_call.1} parent=1 // pred_check
      _
    $region3: #{tpu_custom_call.1} parent=1 // pred_check_branch
      %10 = sbr.rel (0) target = $region5
    $region4: #{tpu_custom_call.1} parent=1 // pred_region
      _
    $region5: #{tpu_custom_call.1} parent=1 // pred_fallthru
      _
    // Predicated region
    $region6: #{tpu_custom_call.1} parent=1 // pred_check
      _
    $region7: #{tpu_custom_call.1} parent=1 // pred_check_branch
      %12 = sbr.rel (0) target = $region9
    $region8: #{tpu_custom_call.1} parent=1 // pred_region
      %s14 = ssub.s32 384, 384
      %15 = vsyncadd [#allocation3], %s14
      %s16 = sshll.u32 [#allocation2], 4
      %s17 = int_to_ptr.vmem [resolvable:$true] %s16
      %22 = dma.hbm_to_vmem [thread:$0]  %s1, 384, %s17, [#allocation3], 128, 128, 8
    $region9: #{tpu_custom_call.1} parent=1 // pred_fallthru
      _
    // Predicated region
    $region10: #{tpu_custom_call.1} parent=1 // pred_check
      _
    $region11: #{tpu_custom_call.1} parent=1 // pred_check_branch
      %24 = sbr.rel (0) target = $region13
    $region12: #{tpu_custom_call.1} parent=1 // pred_region
      %25 = dma.done [#allocation3], 384
    $region13: #{tpu_custom_call.1} parent=1 // pred_fallthru
      _
    %v26 = vld [vmem:[%s0] sm:$0xff]
    %v27 = vld [vmem:[%s0 + $0x8] sm:$0xff]
    %v28 = vlaneseq
    %v29 = vand.u32 %v28, 127
    %30 = vset.pattern.permute.xlu0 0
    %31 = vperm.xlu0 %30, %v26
    %v32 = vpop.permute.xlu0 %31
    %33 = vset.pattern.permute.xlu0 0
    %34 = vperm.xlu0 %33, %v27
    %v35 = vpop.permute.xlu0 %34
    %vm36 = vcmp.eq.s32.totalorder %v29, %v32
    %vm37 = vcmp.eq.s32.totalorder %v29, %v35
    %v38 = vsel %vm36, 1, 0
    %v39 = vsel %vm37, 1, 0
    %v40 = vcvt.s32.f32 %v38
    %v41 = vcvt.s32.f32 %v39
    %v42 = vld [vmem:[#allocation2] sm:$0xff]
    %v43 = vld [vmem:[#allocation2 + $0x8] sm:$0xff]
    %v44 = vld [vmem:[#allocation2 + $0x10] sm:$0xff]
    %vm45 = vcmask 195584
    %v47 = vsel %vm45, %v40, 0
    %v50 = vsel %vm45, %v41, 0
    %52 = vmatprep.subr.mxu0 0.0
    %53 = vmatpush1.msra.mxu0 0.0
    %54 = vmatprep.subr.mxu0 0.0
    %55 = vmatpush1.msra.mxu0 0.0
    %56 = vmatprep.subr.mxu0 0.0
    %57 = vmatpush1.msra.mxu0 0.0
    %58 = vmatprep.subr.mxu0 0.0
    %59 = vmatpush1.msra.mxu0 0.0
    %60 = vmatprep.subr.mxu0 0.0
    %61 = vmatpush1.msra.mxu0 0.0
    %62 = vmatprep.subr.mxu0 0.0
    %63 = vmatpush1.msra.mxu0 0.0
    %64 = vmatprep.subr.mxu0 0.0
    %65 = vmatpush1.msra.mxu0 0.0
    %66 = vmatprep.subr.mxu0 0.0
    %67 = vmatpush1.msra.mxu0 0.0
    %68 = vmatprep.subr.mxu0 0.0
    %69 = vmatpush1.msra.mxu0 0.0
    %70 = vmatprep.subr.mxu0 0.0
    %71 = vmatpush1.msra.mxu0 0.0
    %72 = vmatprep.subr.mxu0 0.0
    %73 = vmatpush1.msra.mxu0 0.0
    %74 = vmatprep.subr.mxu0 0.0
    %75 = vmatpush1.msra.mxu0 0.0
    %76 = vmatprep.subr.mxu0 0.0
    %77 = vmatpush1.msra.mxu0 0.0
    %78 = vmatprep.subr.mxu0 0.0
    %79 = vmatpush1.msra.mxu0 %v44
    %80 = vmatprep.subr.mxu0 0.0
    %81 = vmatpush1.msra.mxu0 %v43
    %82 = vmatprep.subr.mxu0 0.0
    %83 = vmatpush1.msra.mxu0 %v42
    %84 = vmatprep.subr.mxu0 0.0
    %85 = vmatpush2.msra.mxu0 0.0
    %86 = vmatprep.subr.mxu0 0.0
    %87 = vmatpush2.msra.mxu0 0.0
    %88 = vmatprep.subr.mxu0 0.0
    %89 = vmatpush2.msra.mxu0 0.0
    %90 = vmatprep.subr.mxu0 0.0
    %91 = vmatpush2.msra.mxu0 0.0
    %92 = vmatprep.subr.mxu0 0.0
    %93 = vmatpush2.msra.mxu0 0.0
    %94 = vmatprep.subr.mxu0 0.0
    %95 = vmatpush2.msra.mxu0 0.0
    %96 = vmatprep.subr.mxu0 0.0
    %97 = vmatpush2.msra.mxu0 0.0
    %98 = vmatprep.subr.mxu0 0.0
    %99 = vmatpush2.msra.mxu0 0.0
    %100 = vmatprep.subr.mxu0 0.0
    %101 = vmatpush2.msra.mxu0 0.0
    %102 = vmatprep.subr.mxu0 0.0
    %103 = vmatpush2.msra.mxu0 0.0
    %104 = vmatprep.subr.mxu0 0.0
    %105 = vmatpush2.msra.mxu0 0.0
    %106 = vmatprep.subr.mxu0 0.0
    %107 = vmatpush2.msra.mxu0 0.0
    %108 = vmatprep.subr.mxu0 0.0
    %109 = vmatpush2.msra.mxu0 0.0
    %110 = vmatprep.subr.mxu0 0.0
    %111 = vmatpush2.msra.mxu0 0.0
    %112 = vmatprep.subr.mxu0 0.0
    %113 = vmatpush2.msra.mxu0 0.0
    %114 = vmatprep.subr.mxu0 0.0
    %115 = vmatpush2.msra.mxu0 0.0
    %116 = vmatprep.mubr.f32.mxu0 0.0
    %117 = vmatmul.mubr.f32.gmra.mxu0 %v47
    %v118 = vpop.f32.mrf.mxu0
    %v119 = vadd.f32 0.0, %v118
    %v120 = vpop.f32.mrf.mxu0
    %121 = vmatprep.mubr.f32.mxu0 0.0
    %122 = vmatmul.mubr.f32.gmra.mxu0 %v50
    %v123 = vpop.f32.mrf.mxu0
    %v124 = vadd.f32 0.0, %v123
    %v125 = vpop.f32.mrf.mxu0
    %126 = vdwg.mxu0
    %vm127 = vcmask 261120
    %128 = vst.msk [vmem:[#allocation5] sm:$0xff] %vm127, %v119
    %129 = vst.msk [vmem:[#allocation5 + $0x8] sm:$0xff] %vm127, %v124
    // Predicated region
    $region14: #{tpu_custom_call.1} parent=1 // pred_check
      _
    $region15: #{tpu_custom_call.1} parent=1 // pred_check_branch
      %131 = sbr.rel (0) target = $region17
    $region16: #{tpu_custom_call.1} parent=1 // pred_region
      %s133 = ssub.s32 256, 256
      %134 = vsyncadd [#allocation4], %s133
      %s135 = sshll.u32 [#allocation5], 4
      %s136 = int_to_ptr.vmem [resolvable:$true] %s135
      %141 = dma.vmem_to_hbm [thread:$0]  %s136, 256, %s2, [#allocation4], 128, 128, 8
    $region17: #{tpu_custom_call.1} parent=1 // pred_fallthru
      _
    // Predicated region
    $region18: #{tpu_custom_call.1} parent=1 // pred_check
      _
    $region19: #{tpu_custom_call.1} parent=1 // pred_check_branch
      %143 = sbr.rel (0) target = $region21
    $region20: #{tpu_custom_call.1} parent=1 // pred_region
      %144 = dma.done [#allocation4], 256
    $region21: #{tpu_custom_call.1} parent=1 // pred_fallthru
      _
    %145 = vsyncpa [#allocation3], 1
    %146 = vsyncpa [#allocation4], 1

</llo_original>
